<compile_context>
chip_gen: v7x
topology: tpu7x:2x2x1
jax: 0.10.0
libtpu: 0.0.40
codegen_flags: <defaults>
</compile_context>

<pallas_src>
import functools

import jax
import jax.numpy as jnp
from jax.experimental import pallas as pl
from jax.experimental.pallas import tpu as pltpu


def _residual_block_kernel(H, W, C, R, use_mxu_pointwise,
                           x_ref, cp_ref, mask_ref, o_ref,
                           hb1_ref, hb2_ref):
    """Fused ResidualBlock on one (R, H*W) row block (R = NB*C rows).

    cp_ref lane layout (rows = channel pattern tiled NB times):
      [0:9)         dw1 taps (kh*3+kw order)
      [9] bn1 scale [10] bn1 shift [11] prelu alpha
      [12:21)       dw2 taps
      [21] bn2 scale [22] bn2 shift
      [23:23+R)     block-diag pointwise-1 mix matrix M1 (R x R)
      [23+R:23+2R)  block-diag pointwise-2 mix matrix M2 (R x R)
    """
    HW = H * W
    P = W + 1                                    # zero halo width per side

    x = x_ref[...]                               # (R, HW) f32
    cp = cp_ref[...]                             # (R, 23 + 2R) f32
    msk = mask_ref[...]                          # (2, HW) f32 {0,1}
    mask_l = msk[0:1, :]                         # 0 where w == 0
    mask_r = msk[1:2, :]                         # 0 where w == W-1

    def sep_conv(h_in, hb_ref, dw_lane, mix_lane):
        # --- depthwise 3x3 (stride 1, zero pad 1) via zero-haloed scratch ---
        hb_ref[...] = jnp.zeros_like(hb_ref)
        hb_ref[:, P:P + HW] = h_in
        acc = None
        for j, dw in enumerate((-1, 0, 1)):      # group taps by column shift
            grp = None
            for i, dh in enumerate((-1, 0, 1)):
                t = i * 3 + j                    # == kh*3 + kw in the filter
                off = P + dh * W + dw            # static lane offset
                xs = hb_ref[:, pl.ds(off, HW)]   # (R, HW) shifted view
                w_col = cp[:, dw_lane + t:dw_lane + t + 1]   # (R, 1)
                term = w_col * xs
                grp = term if grp is None else grp + term
            if dw == -1:                         # row wraps are zeroed by halo;
                grp = grp * mask_l               # only column wraps need masks
            elif dw == 1:
                grp = grp * mask_r
            acc = grp if acc is None else acc + grp

        # --- pointwise 1x1 (channel mix) with block-diagonal M (R, R) ---
        mix = cp[:, mix_lane:mix_lane + R]
        if use_mxu_pointwise:
            # Production C: one MXU matmul replaces the VPU loop.
            return jax.lax.dot_general(
                mix, acc, (((1,), (0,)), ((), ())),
                precision=jax.lax.Precision.HIGHEST,
                preferred_element_type=jnp.float32)
        # Tiny C: exact-f32 outer-product expansion on the VPU.
        y = None
        for ci in range(R):
            term = mix[:, ci:ci + 1] * acc[ci:ci + 1, :]
            y = term if y is None else y + term
        return y

    # Block 1: sep-conv -> BN -> PReLU
    y = sep_conv(x, hb1_ref, 0, 23)
    y = y * cp[:, 9:10] + cp[:, 10:11]
    y = jnp.where(y > 0, y, cp[:, 11:12] * y)

    # Block 2: sep-conv -> BN (no activation)
    y = sep_conv(y, hb2_ref, 12, 23 + R)
    y = y * cp[:, 21:22] + cp[:, 22:23]

    # Residual add with the original input (still resident in VMEM).
    o_ref[...] = y + x


def residual_block_forward(x_nchw, p):
    """ResidualBlock forward: x -> ConvBlock(act) -> ConvBlock(no act) -> +x."""
    N, C, H, W = x_nchw.shape
    HW = H * W
    eps = 1e-5

    # Samples per grid step: smallest divisor of N giving >= 8 sublane rows.
    NB = N
    for cand in range(1, N + 1):
        if N % cand == 0 and cand * C >= 8:
            NB = cand
            break
    R = NB * C

    def fold_bn(g, b, m, v):
        s = g / jnp.sqrt(v + eps)
        return s.reshape(C, 1), (b - m * s).reshape(C, 1)

    s1, t1 = fold_bn(p["gamma1"], p["beta1"], p["mean1"], p["var1"])
    s2, t2 = fold_bn(p["gamma2"], p["beta2"], p["mean2"], p["var2"])
    a1 = p["alpha1"].reshape(C, 1)

    def dw_to_ck(dw):                        # (3,3,C) -> (C, 9), tap = kh*3+kw
        return jnp.transpose(dw, (2, 0, 1)).reshape(C, 9)

    # Block-diagonal pointwise mix:  y[n*C+co] = sum_ci pw[ci, co] * acc[n*C+ci]
    eye = jnp.eye(NB, dtype=jnp.float32)
    M1 = jnp.kron(eye, p["pw1"].T.astype(jnp.float32))          # (R, R)
    M2 = jnp.kron(eye, p["pw2"].T.astype(jnp.float32))

    per_ch = jnp.concatenate(
        [dw_to_ck(p["dw1"]), s1, t1, a1, dw_to_ck(p["dw2"]), s2, t2],
        axis=1).astype(jnp.float32)                              # (C, 23)
    cparams = jnp.concatenate([jnp.tile(per_ch, (NB, 1)), M1, M2], axis=1)
    CPW = 23 + 2 * R                                             # (R, CPW)

    # Left/right column-border masks, precomputed once (no in-kernel div/mod).
    w_idx = jnp.arange(HW, dtype=jnp.int32) % W
    masks = jnp.stack([w_idx >= 1, w_idx <= W - 2]).astype(jnp.float32)  # (2,HW)

    # NCHW -> (N*C, HW): contiguous reshape, no transpose / no padding.
    x = x_nchw.reshape(N * C, HW)
    if x.dtype != jnp.float32:
        x = x.astype(jnp.float32)

    use_mxu_pointwise = C >= 16
    kernel = functools.partial(_residual_block_kernel, H, W, C, R,
                               use_mxu_pointwise)

    grid_spec = pltpu.PrefetchScalarGridSpec(
        num_scalar_prefetch=0,
        grid=(N // NB,),
        in_specs=[
            pl.BlockSpec((R, HW), lambda i: (i, 0)),       # activations
            pl.BlockSpec((R, CPW), lambda i: (0, 0)),      # all params, 1 DMA
            pl.BlockSpec((2, HW), lambda i: (0, 0)),       # border masks
        ],
        out_specs=pl.BlockSpec((R, HW), lambda i: (i, 0)),
        scratch_shapes=[
            pltpu.VMEM((R, HW + 2 * (W + 1)), jnp.float32),  # halo buf conv 1
            pltpu.VMEM((R, HW + 2 * (W + 1)), jnp.float32),  # halo buf conv 2
        ],
    )

    out = pl.pallas_call(
        kernel,
        out_shape=jax.ShapeDtypeStruct((N * C, HW), jnp.float32),
        grid_spec=grid_spec,
        compiler_params=pltpu.CompilerParams(
            dimension_semantics=("parallel",)),
    )(x, cparams, masks)

    return out.reshape(N, C, H, W)


def ref_forward(x_nchw, p):
    """Pure-JAX reference (lax conv) for correctness check."""
    N, C, H, W = x_nchw.shape
    eps = 1e-5
    dn = ("NHWC", "HWIO", "NHWC")
    x = jnp.transpose(x_nchw, (0, 2, 3, 1)).astype(jnp.float32)

    def sep(h, dw, pw):
        h = jax.lax.conv_general_dilated(h, dw[:, :, None, :], (1, 1),
                                         ((1, 1), (1, 1)), dimension_numbers=dn,
                                         feature_group_count=C)
        h = jax.lax.conv_general_dilated(h, pw[None, None], (1, 1), "VALID",
                                         dimension_numbers=dn)
        return h

    def bn(h, g, b, m, v):
        return (h - m) / jnp.sqrt(v + eps) * g + b

    h = sep(x, p["dw1"], p["pw1"])
    h = bn(h, p["gamma1"], p["beta1"], p["mean1"], p["var1"])
    h = jnp.where(h > 0, h, p["alpha1"] * h)
    h = sep(h, p["dw2"], p["pw2"])
    h = bn(h, p["gamma2"], p["beta2"], p["mean2"], p["var2"])
    return jnp.transpose(h + x, (0, 3, 1, 2))


if __name__ == "__main__":
    N, C, H, W = 2, 4, 16, 16
    key = jax.random.PRNGKey(0)
    ks = jax.random.split(key, 14)

    # Deterministic synthetic parameters (shapes follow ResidualBlock(C)).
    # NOTE: BatchNorm is evaluated in inference mode (running stats).
    params = dict(
        dw1=0.2 * jax.random.normal(ks[0], (3, 3, C), jnp.float32),
        pw1=0.2 * jax.random.normal(ks[1], (C, C), jnp.float32),
        gamma1=1.0 + 0.1 * jax.random.normal(ks[2], (C,), jnp.float32),
        beta1=0.1 * jax.random.normal(ks[3], (C,), jnp.float32),
        mean1=0.1 * jax.random.normal(ks[4], (C,), jnp.float32),
        var1=jnp.abs(jax.random.normal(ks[5], (C,), jnp.float32)) + 0.5,
        alpha1=jnp.full((C,), 0.25, jnp.float32),   # PReLU default init
        dw2=0.2 * jax.random.normal(ks[6], (3, 3, C), jnp.float32),
        pw2=0.2 * jax.random.normal(ks[7], (C, C), jnp.float32),
        gamma2=1.0 + 0.1 * jax.random.normal(ks[8], (C,), jnp.float32),
        beta2=0.1 * jax.random.normal(ks[9], (C,), jnp.float32),
        mean2=0.1 * jax.random.normal(ks[10], (C,), jnp.float32),
        var2=jnp.abs(jax.random.normal(ks[11], (C,), jnp.float32)) + 0.5,
    )
    x = jax.random.normal(ks[12], (N, C, H, W), jnp.float32)

    out = jax.block_until_ready(residual_block_forward(x, params))
    ref = ref_forward(x, params)

    assert out.shape == (N, C, H, W), out.shape
    if not jnp.allclose(out, ref, atol=1e-4, rtol=1e-4):
        raise AssertionError("Pallas kernel output does not match JAX reference")

    print("KERNEL_OK")
</pallas_src>

<mosaic_0001>
module attributes {stable_mosaic.version = 11 : i64} {
  func.func @_residual_block_kernel(%arg0: i32, %arg1: memref<8x256xf32, #tpu.memory_space<vmem>>, %arg2: memref<8x39xf32, #tpu.memory_space<vmem>>, %arg3: memref<2x256xf32, #tpu.memory_space<vmem>>, %arg4: memref<8x256xf32, #tpu.memory_space<vmem>>, %arg5: memref<8x290xf32, #tpu.memory_space<vmem>>, %arg6: memref<8x290xf32, #tpu.memory_space<vmem>>) attributes {dimension_semantics = [#tpu.dimension_semantics<parallel>], iteration_bounds = array<i64: 1>, scalar_prefetch = 0 : i64, scratch_operands = 2 : i64, tpu.core_type = #tpu.core_type<tc>, window_params = [{transform_indices = @transform_0, window_bounds = array<i64: 8, 256>}, {pipeline_mode = #tpu.pipeline_mode<synchronous>, transform_indices = @transform_1, window_bounds = array<i64: 8, 39>}, {pipeline_mode = #tpu.pipeline_mode<synchronous>, transform_indices = @transform_2, window_bounds = array<i64: 2, 256>}, {transform_indices = @transform_3, window_bounds = array<i64: 8, 256>}]} {
    %c0 = arith.constant 0 : index
    %c0_0 = arith.constant 0 : index
    %0 = vector.load %arg1[%c0, %c0_0] : memref<8x256xf32, #tpu.memory_space<vmem>>, vector<8x256xf32>
    %c0_1 = arith.constant 0 : index
    %c0_2 = arith.constant 0 : index
    %1 = vector.load %arg2[%c0_1, %c0_2] : memref<8x39xf32, #tpu.memory_space<vmem>>, vector<8x39xf32>
    %c0_3 = arith.constant 0 : index
    %c0_4 = arith.constant 0 : index
    %2 = vector.load %arg3[%c0_3, %c0_4] : memref<2x256xf32, #tpu.memory_space<vmem>>, vector<2x256xf32>
    %3 = vector.extract_strided_slice %2 {offsets = [0, 0], sizes = [1, 256], strides = [1, 1]} : vector<2x256xf32> to vector<1x256xf32>
    %4 = vector.extract_strided_slice %2 {offsets = [1, 0], sizes = [1, 256], strides = [1, 1]} : vector<2x256xf32> to vector<1x256xf32>
    %cst = arith.constant 0.000000e+00 : f32
    %5 = vector.broadcast %cst : f32 to vector<8x290xf32>
    %c0_5 = arith.constant 0 : index
    %c0_6 = arith.constant 0 : index
    %6 = vector.load %arg5[%c0_5, %c0_6] : memref<8x290xf32, #tpu.memory_space<vmem>>, vector<8x290xf32>
    tpu.vector_store %arg5[%c0_5, %c0_6], %5 {strides = array<i32>} : memref<8x290xf32, #tpu.memory_space<vmem>>, vector<8x290xf32>,
    %c0_7 = arith.constant 0 : index
    %c17 = arith.constant 17 : index
    %7 = vector.load %arg5[%c0_7, %c17] : memref<8x290xf32, #tpu.memory_space<vmem>>, vector<8x256xf32>
    tpu.vector_store %arg5[%c0_7, %c17], %0 {strides = array<i32>} : memref<8x290xf32, #tpu.memory_space<vmem>>, vector<8x256xf32>,
    %c0_8 = arith.constant 0 : index
    %c0_9 = arith.constant 0 : index
    %8 = vector.load %arg5[%c0_8, %c0_9] : memref<8x290xf32, #tpu.memory_space<vmem>>, vector<8x256xf32>
    %9 = vector.extract_strided_slice %1 {offsets = [0, 0], sizes = [8, 1], strides = [1, 1]} : vector<8x39xf32> to vector<8x1xf32>
    %10 = vector.broadcast %9 : vector<8x1xf32> to vector<8x256xf32>
    %11 = arith.mulf %10, %8 : vector<8x256xf32>
    %c0_10 = arith.constant 0 : index
    %c16 = arith.constant 16 : index
    %12 = vector.load %arg5[%c0_10, %c16] : memref<8x290xf32, #tpu.memory_space<vmem>>, vector<8x256xf32>
    %13 = vector.extract_strided_slice %1 {offsets = [0, 3], sizes = [8, 1], strides = [1, 1]} : vector<8x39xf32> to vector<8x1xf32>
    %14 = vector.broadcast %13 : vector<8x1xf32> to vector<8x256xf32>
    %15 = arith.mulf %14, %12 : vector<8x256xf32>
    %16 = arith.addf %11, %15 : vector<8x256xf32>
    %c0_11 = arith.constant 0 : index
    %c32 = arith.constant 32 : index
    %17 = vector.load %arg5[%c0_11, %c32] : memref<8x290xf32, #tpu.memory_space<vmem>>, vector<8x256xf32>
    %18 = vector.extract_strided_slice %1 {offsets = [0, 6], sizes = [8, 1], strides = [1, 1]} : vector<8x39xf32> to vector<8x1xf32>
    %19 = vector.broadcast %18 : vector<8x1xf32> to vector<8x256xf32>
    %20 = arith.mulf %19, %17 : vector<8x256xf32>
    %21 = arith.addf %16, %20 : vector<8x256xf32>
    %22 = vector.broadcast %3 : vector<1x256xf32> to vector<8x256xf32>
    %23 = arith.mulf %21, %22 : vector<8x256xf32>
    %c0_12 = arith.constant 0 : index
    %c1 = arith.constant 1 : index
    %24 = vector.load %arg5[%c0_12, %c1] : memref<8x290xf32, #tpu.memory_space<vmem>>, vector<8x256xf32>
    %25 = vector.extract_strided_slice %1 {offsets = [0, 1], sizes = [8, 1], strides = [1, 1]} : vector<8x39xf32> to vector<8x1xf32>
    %26 = vector.broadcast %25 : vector<8x1xf32> to vector<8x256xf32>
    %27 = arith.mulf %26, %24 : vector<8x256xf32>
    %c0_13 = arith.constant 0 : index
    %c17_14 = arith.constant 17 : index
    %28 = vector.load %arg5[%c0_13, %c17_14] : memref<8x290xf32, #tpu.memory_space<vmem>>, vector<8x256xf32>
    %29 = vector.extract_strided_slice %1 {offsets = [0, 4], sizes = [8, 1], strides = [1, 1]} : vector<8x39xf32> to vector<8x1xf32>
    %30 = vector.broadcast %29 : vector<8x1xf32> to vector<8x256xf32>
    %31 = arith.mulf %30, %28 : vector<8x256xf32>
    %32 = arith.addf %27, %31 : vector<8x256xf32>
    %c0_15 = arith.constant 0 : index
    %c33 = arith.constant 33 : index
    %33 = vector.load %arg5[%c0_15, %c33] : memref<8x290xf32, #tpu.memory_space<vmem>>, vector<8x256xf32>
    %34 = vector.extract_strided_slice %1 {offsets = [0, 7], sizes = [8, 1], strides = [1, 1]} : vector<8x39xf32> to vector<8x1xf32>
    %35 = vector.broadcast %34 : vector<8x1xf32> to vector<8x256xf32>
    %36 = arith.mulf %35, %33 : vector<8x256xf32>
    %37 = arith.addf %32, %36 : vector<8x256xf32>
    %38 = arith.addf %23, %37 : vector<8x256xf32>
    %c0_16 = arith.constant 0 : index
    %c2 = arith.constant 2 : index
    %39 = vector.load %arg5[%c0_16, %c2] : memref<8x290xf32, #tpu.memory_space<vmem>>, vector<8x256xf32>
    %40 = vector.extract_strided_slice %1 {offsets = [0, 2], sizes = [8, 1], strides = [1, 1]} : vector<8x39xf32> to vector<8x1xf32>
    %41 = vector.broadcast %40 : vector<8x1xf32> to vector<8x256xf32>
    %42 = arith.mulf %41, %39 : vector<8x256xf32>
    %c0_17 = arith.constant 0 : index
    %c18 = arith.constant 18 : index
    %43 = vector.load %arg5[%c0_17, %c18] : memref<8x290xf32, #tpu.memory_space<vmem>>, vector<8x256xf32>
    %44 = vector.extract_strided_slice %1 {offsets = [0, 5], sizes = [8, 1], strides = [1, 1]} : vector<8x39xf32> to vector<8x1xf32>
    %45 = vector.broadcast %44 : vector<8x1xf32> to vector<8x256xf32>
    %46 = arith.mulf %45, %43 : vector<8x256xf32>
    %47 = arith.addf %42, %46 : vector<8x256xf32>
    %c0_18 = arith.constant 0 : index
    %c34 = arith.constant 34 : index
    %48 = vector.load %arg5[%c0_18, %c34] : memref<8x290xf32, #tpu.memory_space<vmem>>, vector<8x256xf32>
    %49 = vector.extract_strided_slice %1 {offsets = [0, 8], sizes = [8, 1], strides = [1, 1]} : vector<8x39xf32> to vector<8x1xf32>
    %50 = vector.broadcast %49 : vector<8x1xf32> to vector<8x256xf32>
    %51 = arith.mulf %50, %48 : vector<8x256xf32>
    %52 = arith.addf %47, %51 : vector<8x256xf32>
    %53 = vector.broadcast %4 : vector<1x256xf32> to vector<8x256xf32>
    %54 = arith.mulf %52, %53 : vector<8x256xf32>
    %55 = arith.addf %38, %54 : vector<8x256xf32>
    %56 = vector.extract_strided_slice %1 {offsets = [0, 23], sizes = [8, 8], strides = [1, 1]} : vector<8x39xf32> to vector<8x8xf32>
    %57 = vector.extract_strided_slice %56 {offsets = [0, 0], sizes = [8, 1], strides = [1, 1]} : vector<8x8xf32> to vector<8x1xf32>
    %58 = vector.extract_strided_slice %55 {offsets = [0, 0], sizes = [1, 256], strides = [1, 1]} : vector<8x256xf32> to vector<1x256xf32>
    %59 = vector.broadcast %57 : vector<8x1xf32> to vector<8x256xf32>
    %60 = vector.broadcast %58 : vector<1x256xf32> to vector<8x256xf32>
    %61 = arith.mulf %59, %60 : vector<8x256xf32>
    %62 = vector.extract_strided_slice %56 {offsets = [0, 1], sizes = [8, 1], strides = [1, 1]} : vector<8x8xf32> to vector<8x1xf32>
    %63 = vector.extract_strided_slice %55 {offsets = [1, 0], sizes = [1, 256], strides = [1, 1]} : vector<8x256xf32> to vector<1x256xf32>
    %64 = vector.broadcast %62 : vector<8x1xf32> to vector<8x256xf32>
    %65 = vector.broadcast %63 : vector<1x256xf32> to vector<8x256xf32>
    %66 = arith.mulf %64, %65 : vector<8x256xf32>
    %67 = arith.addf %61, %66 : vector<8x256xf32>
    %68 = vector.extract_strided_slice %56 {offsets = [0, 2], sizes = [8, 1], strides = [1, 1]} : vector<8x8xf32> to vector<8x1xf32>
    %69 = vector.extract_strided_slice %55 {offsets = [2, 0], sizes = [1, 256], strides = [1, 1]} : vector<8x256xf32> to vector<1x256xf32>
    %70 = vector.broadcast %68 : vector<8x1xf32> to vector<8x256xf32>
    %71 = vector.broadcast %69 : vector<1x256xf32> to vector<8x256xf32>
    %72 = arith.mulf %70, %71 : vector<8x256xf32>
    %73 = arith.addf %67, %72 : vector<8x256xf32>
    %74 = vector.extract_strided_slice %56 {offsets = [0, 3], sizes = [8, 1], strides = [1, 1]} : vector<8x8xf32> to vector<8x1xf32>
    %75 = vector.extract_strided_slice %55 {offsets = [3, 0], sizes = [1, 256], strides = [1, 1]} : vector<8x256xf32> to vector<1x256xf32>
    %76 = vector.broadcast %74 : vector<8x1xf32> to vector<8x256xf32>
    %77 = vector.broadcast %75 : vector<1x256xf32> to vector<8x256xf32>
    %78 = arith.mulf %76, %77 : vector<8x256xf32>
    %79 = arith.addf %73, %78 : vector<8x256xf32>
    %80 = vector.extract_strided_slice %56 {offsets = [0, 4], sizes = [8, 1], strides = [1, 1]} : vector<8x8xf32> to vector<8x1xf32>
    %81 = vector.extract_strided_slice %55 {offsets = [4, 0], sizes = [1, 256], strides = [1, 1]} : vector<8x256xf32> to vector<1x256xf32>
    %82 = vector.broadcast %80 : vector<8x1xf32> to vector<8x256xf32>
    %83 = vector.broadcast %81 : vector<1x256xf32> to vector<8x256xf32>
    %84 = arith.mulf %82, %83 : vector<8x256xf32>
    %85 = arith.addf %79, %84 : vector<8x256xf32>
    %86 = vector.extract_strided_slice %56 {offsets = [0, 5], sizes = [8, 1], strides = [1, 1]} : vector<8x8xf32> to vector<8x1xf32>
    %87 = vector.extract_strided_slice %55 {offsets = [5, 0], sizes = [1, 256], strides = [1, 1]} : vector<8x256xf32> to vector<1x256xf32>
    %88 = vector.broadcast %86 : vector<8x1xf32> to vector<8x256xf32>
    %89 = vector.broadcast %87 : vector<1x256xf32> to vector<8x256xf32>
    %90 = arith.mulf %88, %89 : vector<8x256xf32>
    %91 = arith.addf %85, %90 : vector<8x256xf32>
    %92 = vector.extract_strided_slice %56 {offsets = [0, 6], sizes = [8, 1], strides = [1, 1]} : vector<8x8xf32> to vector<8x1xf32>
    %93 = vector.extract_strided_slice %55 {offsets = [6, 0], sizes = [1, 256], strides = [1, 1]} : vector<8x256xf32> to vector<1x256xf32>
    %94 = vector.broadcast %92 : vector<8x1xf32> to vector<8x256xf32>
    %95 = vector.broadcast %93 : vector<1x256xf32> to vector<8x256xf32>
    %96 = arith.mulf %94, %95 : vector<8x256xf32>
    %97 = arith.addf %91, %96 : vector<8x256xf32>
    %98 = vector.extract_strided_slice %56 {offsets = [0, 7], sizes = [8, 1], strides = [1, 1]} : vector<8x8xf32> to vector<8x1xf32>
    %99 = vector.extract_strided_slice %55 {offsets = [7, 0], sizes = [1, 256], strides = [1, 1]} : vector<8x256xf32> to vector<1x256xf32>
    %100 = vector.broadcast %98 : vector<8x1xf32> to vector<8x256xf32>
    %101 = vector.broadcast %99 : vector<1x256xf32> to vector<8x256xf32>
    %102 = arith.mulf %100, %101 : vector<8x256xf32>
    %103 = arith.addf %97, %102 : vector<8x256xf32>
    %104 = vector.extract_strided_slice %1 {offsets = [0, 9], sizes = [8, 1], strides = [1, 1]} : vector<8x39xf32> to vector<8x1xf32>
    %105 = vector.broadcast %104 : vector<8x1xf32> to vector<8x256xf32>
    %106 = arith.mulf %103, %105 : vector<8x256xf32>
    %107 = vector.extract_strided_slice %1 {offsets = [0, 10], sizes = [8, 1], strides = [1, 1]} : vector<8x39xf32> to vector<8x1xf32>
    %108 = vector.broadcast %107 : vector<8x1xf32> to vector<8x256xf32>
    %109 = arith.addf %106, %108 : vector<8x256xf32>
    %cst_19 = arith.constant 0.000000e+00 : f32
    %110 = vector.broadcast %cst_19 : f32 to vector<8x256xf32>
    %111 = arith.cmpf ogt, %109, %110 : vector<8x256xf32>
    %112 = vector.extract_strided_slice %1 {offsets = [0, 11], sizes = [8, 1], strides = [1, 1]} : vector<8x39xf32> to vector<8x1xf32>
    %113 = vector.broadcast %112 : vector<8x1xf32> to vector<8x256xf32>
    %114 = arith.mulf %113, %109 : vector<8x256xf32>
    %115 = arith.select %111, %109, %114 : vector<8x256xi1>, vector<8x256xf32>
    %cst_20 = arith.constant 0.000000e+00 : f32
    %116 = vector.broadcast %cst_20 : f32 to vector<8x290xf32>
    %c0_21 = arith.constant 0 : index
    %c0_22 = arith.constant 0 : index
    %117 = vector.load %arg6[%c0_21, %c0_22] : memref<8x290xf32, #tpu.memory_space<vmem>>, vector<8x290xf32>
    tpu.vector_store %arg6[%c0_21, %c0_22], %116 {strides = array<i32>} : memref<8x290xf32, #tpu.memory_space<vmem>>, vector<8x290xf32>,
    %c0_23 = arith.constant 0 : index
    %c17_24 = arith.constant 17 : index
    %118 = vector.load %arg6[%c0_23, %c17_24] : memref<8x290xf32, #tpu.memory_space<vmem>>, vector<8x256xf32>
    tpu.vector_store %arg6[%c0_23, %c17_24], %115 {strides = array<i32>} : memref<8x290xf32, #tpu.memory_space<vmem>>, vector<8x256xf32>,
    %c0_25 = arith.constant 0 : index
    %c0_26 = arith.constant 0 : index
    %119 = vector.load %arg6[%c0_25, %c0_26] : memref<8x290xf32, #tpu.memory_space<vmem>>, vector<8x256xf32>
    %120 = vector.extract_strided_slice %1 {offsets = [0, 12], sizes = [8, 1], strides = [1, 1]} : vector<8x39xf32> to vector<8x1xf32>
    %121 = vector.broadcast %120 : vector<8x1xf32> to vector<8x256xf32>
    %122 = arith.mulf %121, %119 : vector<8x256xf32>
    %c0_27 = arith.constant 0 : index
    %c16_28 = arith.constant 16 : index
    %123 = vector.load %arg6[%c0_27, %c16_28] : memref<8x290xf32, #tpu.memory_space<vmem>>, vector<8x256xf32>
    %124 = vector.extract_strided_slice %1 {offsets = [0, 15], sizes = [8, 1], strides = [1, 1]} : vector<8x39xf32> to vector<8x1xf32>
    %125 = vector.broadcast %124 : vector<8x1xf32> to vector<8x256xf32>
    %126 = arith.mulf %125, %123 : vector<8x256xf32>
    %127 = arith.addf %122, %126 : vector<8x256xf32>
    %c0_29 = arith.constant 0 : index
    %c32_30 = arith.constant 32 : index
    %128 = vector.load %arg6[%c0_29, %c32_30] : memref<8x290xf32, #tpu.memory_space<vmem>>, vector<8x256xf32>
    %129 = vector.extract_strided_slice %1 {offsets = [0, 18], sizes = [8, 1], strides = [1, 1]} : vector<8x39xf32> to vector<8x1xf32>
    %130 = vector.broadcast %129 : vector<8x1xf32> to vector<8x256xf32>
    %131 = arith.mulf %130, %128 : vector<8x256xf32>
    %132 = arith.addf %127, %131 : vector<8x256xf32>
    %133 = vector.broadcast %3 : vector<1x256xf32> to vector<8x256xf32>
    %134 = arith.mulf %132, %133 : vector<8x256xf32>
    %c0_31 = arith.constant 0 : index
    %c1_32 = arith.constant 1 : index
    %135 = vector.load %arg6[%c0_31, %c1_32] : memref<8x290xf32, #tpu.memory_space<vmem>>, vector<8x256xf32>
    %136 = vector.extract_strided_slice %1 {offsets = [0, 13], sizes = [8, 1], strides = [1, 1]} : vector<8x39xf32> to vector<8x1xf32>
    %137 = vector.broadcast %136 : vector<8x1xf32> to vector<8x256xf32>
    %138 = arith.mulf %137, %135 : vector<8x256xf32>
    %c0_33 = arith.constant 0 : index
    %c17_34 = arith.constant 17 : index
    %139 = vector.load %arg6[%c0_33, %c17_34] : memref<8x290xf32, #tpu.memory_space<vmem>>, vector<8x256xf32>
    %140 = vector.extract_strided_slice %1 {offsets = [0, 16], sizes = [8, 1], strides = [1, 1]} : vector<8x39xf32> to vector<8x1xf32>
    %141 = vector.broadcast %140 : vector<8x1xf32> to vector<8x256xf32>
    %142 = arith.mulf %141, %139 : vector<8x256xf32>
    %143 = arith.addf %138, %142 : vector<8x256xf32>
    %c0_35 = arith.constant 0 : index
    %c33_36 = arith.constant 33 : index
    %144 = vector.load %arg6[%c0_35, %c33_36] : memref<8x290xf32, #tpu.memory_space<vmem>>, vector<8x256xf32>
    %145 = vector.extract_strided_slice %1 {offsets = [0, 19], sizes = [8, 1], strides = [1, 1]} : vector<8x39xf32> to vector<8x1xf32>
    %146 = vector.broadcast %145 : vector<8x1xf32> to vector<8x256xf32>
    %147 = arith.mulf %146, %144 : vector<8x256xf32>
    %148 = arith.addf %143, %147 : vector<8x256xf32>
    %149 = arith.addf %134, %148 : vector<8x256xf32>
    %c0_37 = arith.constant 0 : index
    %c2_38 = arith.constant 2 : index
    %150 = vector.load %arg6[%c0_37, %c2_38] : memref<8x290xf32, #tpu.memory_space<vmem>>, vector<8x256xf32>
    %151 = vector.extract_strided_slice %1 {offsets = [0, 14], sizes = [8, 1], strides = [1, 1]} : vector<8x39xf32> to vector<8x1xf32>
    %152 = vector.broadcast %151 : vector<8x1xf32> to vector<8x256xf32>
    %153 = arith.mulf %152, %150 : vector<8x256xf32>
    %c0_39 = arith.constant 0 : index
    %c18_40 = arith.constant 18 : index
    %154 = vector.load %arg6[%c0_39, %c18_40] : memref<8x290xf32, #tpu.memory_space<vmem>>, vector<8x256xf32>
    %155 = vector.extract_strided_slice %1 {offsets = [0, 17], sizes = [8, 1], strides = [1, 1]} : vector<8x39xf32> to vector<8x1xf32>
    %156 = vector.broadcast %155 : vector<8x1xf32> to vector<8x256xf32>
    %157 = arith.mulf %156, %154 : vector<8x256xf32>
    %158 = arith.addf %153, %157 : vector<8x256xf32>
    %c0_41 = arith.constant 0 : index
    %c34_42 = arith.constant 34 : index
    %159 = vector.load %arg6[%c0_41, %c34_42] : memref<8x290xf32, #tpu.memory_space<vmem>>, vector<8x256xf32>
    %160 = vector.extract_strided_slice %1 {offsets = [0, 20], sizes = [8, 1], strides = [1, 1]} : vector<8x39xf32> to vector<8x1xf32>
    %161 = vector.broadcast %160 : vector<8x1xf32> to vector<8x256xf32>
    %162 = arith.mulf %161, %159 : vector<8x256xf32>
    %163 = arith.addf %158, %162 : vector<8x256xf32>
    %164 = vector.broadcast %4 : vector<1x256xf32> to vector<8x256xf32>
    %165 = arith.mulf %163, %164 : vector<8x256xf32>
    %166 = arith.addf %149, %165 : vector<8x256xf32>
    %167 = vector.extract_strided_slice %1 {offsets = [0, 31], sizes = [8, 8], strides = [1, 1]} : vector<8x39xf32> to vector<8x8xf32>
    %168 = vector.extract_strided_slice %167 {offsets = [0, 0], sizes = [8, 1], strides = [1, 1]} : vector<8x8xf32> to vector<8x1xf32>
    %169 = vector.extract_strided_slice %166 {offsets = [0, 0], sizes = [1, 256], strides = [1, 1]} : vector<8x256xf32> to vector<1x256xf32>
    %170 = vector.broadcast %168 : vector<8x1xf32> to vector<8x256xf32>
    %171 = vector.broadcast %169 : vector<1x256xf32> to vector<8x256xf32>
    %172 = arith.mulf %170, %171 : vector<8x256xf32>
    %173 = vector.extract_strided_slice %167 {offsets = [0, 1], sizes = [8, 1], strides = [1, 1]} : vector<8x8xf32> to vector<8x1xf32>
    %174 = vector.extract_strided_slice %166 {offsets = [1, 0], sizes = [1, 256], strides = [1, 1]} : vector<8x256xf32> to vector<1x256xf32>
    %175 = vector.broadcast %173 : vector<8x1xf32> to vector<8x256xf32>
    %176 = vector.broadcast %174 : vector<1x256xf32> to vector<8x256xf32>
    %177 = arith.mulf %175, %176 : vector<8x256xf32>
    %178 = arith.addf %172, %177 : vector<8x256xf32>
    %179 = vector.extract_strided_slice %167 {offsets = [0, 2], sizes = [8, 1], strides = [1, 1]} : vector<8x8xf32> to vector<8x1xf32>
    %180 = vector.extract_strided_slice %166 {offsets = [2, 0], sizes = [1, 256], strides = [1, 1]} : vector<8x256xf32> to vector<1x256xf32>
    %181 = vector.broadcast %179 : vector<8x1xf32> to vector<8x256xf32>
    %182 = vector.broadcast %180 : vector<1x256xf32> to vector<8x256xf32>
    %183 = arith.mulf %181, %182 : vector<8x256xf32>
    %184 = arith.addf %178, %183 : vector<8x256xf32>
    %185 = vector.extract_strided_slice %167 {offsets = [0, 3], sizes = [8, 1], strides = [1, 1]} : vector<8x8xf32> to vector<8x1xf32>
    %186 = vector.extract_strided_slice %166 {offsets = [3, 0], sizes = [1, 256], strides = [1, 1]} : vector<8x256xf32> to vector<1x256xf32>
    %187 = vector.broadcast %185 : vector<8x1xf32> to vector<8x256xf32>
    %188 = vector.broadcast %186 : vector<1x256xf32> to vector<8x256xf32>
    %189 = arith.mulf %187, %188 : vector<8x256xf32>
    %190 = arith.addf %184, %189 : vector<8x256xf32>
    %191 = vector.extract_strided_slice %167 {offsets = [0, 4], sizes = [8, 1], strides = [1, 1]} : vector<8x8xf32> to vector<8x1xf32>
    %192 = vector.extract_strided_slice %166 {offsets = [4, 0], sizes = [1, 256], strides = [1, 1]} : vector<8x256xf32> to vector<1x256xf32>
    %193 = vector.broadcast %191 : vector<8x1xf32> to vector<8x256xf32>
    %194 = vector.broadcast %192 : vector<1x256xf32> to vector<8x256xf32>
    %195 = arith.mulf %193, %194 : vector<8x256xf32>
    %196 = arith.addf %190, %195 : vector<8x256xf32>
    %197 = vector.extract_strided_slice %167 {offsets = [0, 5], sizes = [8, 1], strides = [1, 1]} : vector<8x8xf32> to vector<8x1xf32>
    %198 = vector.extract_strided_slice %166 {offsets = [5, 0], sizes = [1, 256], strides = [1, 1]} : vector<8x256xf32> to vector<1x256xf32>
    %199 = vector.broadcast %197 : vector<8x1xf32> to vector<8x256xf32>
    %200 = vector.broadcast %198 : vector<1x256xf32> to vector<8x256xf32>
    %201 = arith.mulf %199, %200 : vector<8x256xf32>
    %202 = arith.addf %196, %201 : vector<8x256xf32>
    %203 = vector.extract_strided_slice %167 {offsets = [0, 6], sizes = [8, 1], strides = [1, 1]} : vector<8x8xf32> to vector<8x1xf32>
    %204 = vector.extract_strided_slice %166 {offsets = [6, 0], sizes = [1, 256], strides = [1, 1]} : vector<8x256xf32> to vector<1x256xf32>
    %205 = vector.broadcast %203 : vector<8x1xf32> to vector<8x256xf32>
    %206 = vector.broadcast %204 : vector<1x256xf32> to vector<8x256xf32>
    %207 = arith.mulf %205, %206 : vector<8x256xf32>
    %208 = arith.addf %202, %207 : vector<8x256xf32>
    %209 = vector.extract_strided_slice %167 {offsets = [0, 7], sizes = [8, 1], strides = [1, 1]} : vector<8x8xf32> to vector<8x1xf32>
    %210 = vector.extract_strided_slice %166 {offsets = [7, 0], sizes = [1, 256], strides = [1, 1]} : vector<8x256xf32> to vector<1x256xf32>
    %211 = vector.broadcast %209 : vector<8x1xf32> to vector<8x256xf32>
    %212 = vector.broadcast %210 : vector<1x256xf32> to vector<8x256xf32>
    %213 = arith.mulf %211, %212 : vector<8x256xf32>
    %214 = arith.addf %208, %213 : vector<8x256xf32>
    %215 = vector.extract_strided_slice %1 {offsets = [0, 21], sizes = [8, 1], strides = [1, 1]} : vector<8x39xf32> to vector<8x1xf32>
    %216 = vector.broadcast %215 : vector<8x1xf32> to vector<8x256xf32>
    %217 = arith.mulf %214, %216 : vector<8x256xf32>
    %218 = vector.extract_strided_slice %1 {offsets = [0, 22], sizes = [8, 1], strides = [1, 1]} : vector<8x39xf32> to vector<8x1xf32>
    %219 = vector.broadcast %218 : vector<8x1xf32> to vector<8x256xf32>
    %220 = arith.addf %217, %219 : vector<8x256xf32>
    %221 = arith.addf %220, %0 : vector<8x256xf32>
    %c0_43 = arith.constant 0 : index
    %c0_44 = arith.constant 0 : index
    %222 = vector.load %arg4[%c0_43, %c0_44] : memref<8x256xf32, #tpu.memory_space<vmem>>, vector<8x256xf32>
    tpu.vector_store %arg4[%c0_43, %c0_44], %221 {strides = array<i32>} : memref<8x256xf32, #tpu.memory_space<vmem>>, vector<8x256xf32>,
    return
  }
  func.func @transform_0(%arg0: i32) -> (i32, i32) {
    %c0_i32 = arith.constant 0 : i32
    %c0_i32_0 = arith.constant 0 : i32
    return %arg0, %c0_i32 : i32, i32
  }
  func.func @transform_1(%arg0: i32) -> (i32, i32) {
    %c0_i32 = arith.constant 0 : i32
    %c0_i32_0 = arith.constant 0 : i32
    %c0_i32_1 = arith.constant 0 : i32
    return %c0_i32, %c0_i32_0 : i32, i32
  }
  func.func @transform_2(%arg0: i32) -> (i32, i32) {
    %c0_i32 = arith.constant 0 : i32
    %c0_i32_0 = arith.constant 0 : i32
    %c0_i32_1 = arith.constant 0 : i32
    return %c0_i32, %c0_i32_0 : i32, i32
  }
  func.func @transform_3(%arg0: i32) -> (i32, i32) {
    %c0_i32 = arith.constant 0 : i32
    %c0_i32_0 = arith.constant 0 : i32
    return %arg0, %c0_i32 : i32, i32
  }
}

</mosaic_0001>

<llo_original>
// kernel: tpu_custom_call.1
$region0: #{tpu_custom_call.1}
  #allocation0 [shape = 'u32[]', space=smem, size = 0x4, offset = 0x4, fixed_abs, tag = 'smem constant byte address 0x4 - core index']
  #allocation1 [shape = 'u32[144,128]{1,0:T(1,128)}', space=vmem, size = 0x12000, scoped, tag = 'internal scratch']
  #allocation2 [shape = 'f32[8,290]{1,0:T(8,128)}', space=vmem, size = 0x3000, scoped, tag = 'scratch operand']
  #allocation3 [shape = 'f32[8,290]{1,0:T(8,128)}', space=vmem, size = 0x3000, scoped, tag = 'scratch operand']
  %s0 = inlined_call_operand.hbm [shape: f32[8,256], index: 0, kind: input, shape index: {}]
  %s1 = inlined_call_operand.hbm [shape: f32[8,39], index: 1, kind: input, shape index: {}]
  %s2 = inlined_call_operand.vmem [shape: f32[2,256], index: 2, kind: input, shape index: {}]
  %s3 = inlined_call_operand.hbm [shape: f32[8,256], index: 3, kind: output, shape index: {}]
  %s4 = sld [smem:[#allocation0]]
  $region30: #{tpu_custom_call.1} parent=0
    _
  %s6 = ssub.s32 1, %s4
  %s7 = scalar_select 0, %s6, %s4
  $region1: #{tpu_custom_call.1} parent=0
    #allocation4 [shape = 'u8[8192]{0}', space=vmem, size = 0x2000, scoped, tag = 'input window, operand 0, single buffered']
    #allocation5 [shape = 's32[1]{0}', space=sflag, size = 0x4, scoped, tag = 'scoped memory for tpu_custom_call.1']
    #allocation6 [shape = 's32[1]{0}', space=sflag, size = 0x4, scoped, tag = 'scoped memory for tpu_custom_call.1']
    #allocation7 [shape = 'u8[4096]{0}', space=vmem, size = 0x1000, scoped, tag = 'input window, operand 1, single buffered']
    #allocation8 [shape = 's32[1]{0}', space=sflag, size = 0x4, scoped, tag = 'scoped memory for tpu_custom_call.1']
    #allocation9 [shape = 'u8[8192]{0}', space=vmem, size = 0x2000, scoped, tag = 'output window, operand 0, single buffered']
    %8 = vsyncpa [#allocation5], 0
    %9 = vsyncpa [#allocation8], 0
    %10 = vsyncpa [#allocation6], 0
    // Predicated region
    $region2: #{tpu_custom_call.1} parent=1 // pred_check
      _
    $region3: #{tpu_custom_call.1} parent=1 // pred_check_branch
      %12 = sbr.rel (0) target = $region5
    $region4: #{tpu_custom_call.1} parent=1 // pred_region
      %s14 = ssub.s32 256, 256
      %15 = vsyncadd [#allocation5], %s14
      %s17 = sshll.u32 [#allocation4], 4
      %s18 = int_to_ptr.vmem [resolvable:$true] %s17
      %20 = dma.hbm_to_vmem [thread:$0]  %s0, 256, %s18, [#allocation5]
    $region5: #{tpu_custom_call.1} parent=1 // pred_fallthru
      _
    // Predicated region
    $region6: #{tpu_custom_call.1} parent=1 // pred_check
      _
    $region7: #{tpu_custom_call.1} parent=1 // pred_check_branch
      %22 = sbr.rel (0) target = $region9
    $region8: #{tpu_custom_call.1} parent=1 // pred_region
      %s24 = ssub.s32 128, 128
      %25 = vsyncadd [#allocation8], %s24
      %s27 = sshll.u32 [#allocation7], 4
      %s28 = int_to_ptr.vmem [resolvable:$true] %s27
      %30 = dma.hbm_to_vmem [thread:$0]  %s1, 128, %s28, [#allocation8]
    $region9: #{tpu_custom_call.1} parent=1 // pred_fallthru
      _
    // Predicated region
    $region10: #{tpu_custom_call.1} parent=1 // pred_check
      _
    $region11: #{tpu_custom_call.1} parent=1 // pred_check_branch
      %32 = sbr.rel (0) target = $region13
    $region12: #{tpu_custom_call.1} parent=1 // pred_region
      _
    $region13: #{tpu_custom_call.1} parent=1 // pred_fallthru
      _
    // Predicated region
    $region14: #{tpu_custom_call.1} parent=1 // pred_check
      _
    $region15: #{tpu_custom_call.1} parent=1 // pred_check_branch
      %34 = sbr.rel (0) target = $region17
    $region16: #{tpu_custom_call.1} parent=1 // pred_region
      %35 = dma.done [#allocation5], 256
    $region17: #{tpu_custom_call.1} parent=1 // pred_fallthru
      _
    // Predicated region
    $region18: #{tpu_custom_call.1} parent=1 // pred_check
      _
    $region19: #{tpu_custom_call.1} parent=1 // pred_check_branch
      %37 = sbr.rel (0) target = $region21
    $region20: #{tpu_custom_call.1} parent=1 // pred_region
      %38 = dma.done [#allocation8], 128
    $region21: #{tpu_custom_call.1} parent=1 // pred_fallthru
      _
    %v39 = vld [vmem:[#allocation4] sm:$0xff]
    %v40 = vld [vmem:[#allocation4 + $0x8] sm:$0xff]
    %v41 = vld [vmem:[#allocation7] sm:$0xff]
    %v42 = vld [vmem:[%s2] sm:$0xf]
    %43 = vst [vmem:[#allocation2] sm:$0xff] 0.0
    %44 = vst [vmem:[#allocation2 + $0x8] sm:$0xff] 0.0
    %vm45 = vcmask 277504
    %46 = vst.msk [vmem:[#allocation2 + $0x10] sm:$0xff] %vm45, 0.0
    %49 = vrot.lane.b32.xlu0 %v39, 17
    %v50 = vpop.permute.xlu0 %49
    %51 = vrot.lane.b32.xlu0 %v40, 17
    %v52 = vpop.permute.xlu0 %51
    %vm53 = vcmask 138240
    %v54 = vsel %vm53, %v50, %v52
    %vm58 = vcmask 1047688
    %59 = vst.msk [vmem:[#allocation2] sm:$0xff] %vm58, %v50
    %60 = vst [vmem:[#allocation2 + $0x8] sm:$0xff] %v54
    %61 = vst.msk [vmem:[#allocation2 + $0x10] sm:$0xff] %vm53, %v52
    %v62 = vld [vmem:[#allocation2] sm:$0xff]
    %v63 = vld [vmem:[#allocation2 + $0x8] sm:$0xff]
    %65 = vset.pattern.permute.xlu0 0
    %66 = vperm.xlu0 %65, %v41
    %v67 = vpop.permute.xlu0 %66
    %v69 = vmul.f32 %v67, %v62
    %v70 = vmul.f32 %v67, %v63
    %v71 = vld [vmem:[#allocation2] sm:$0xff]
    %v72 = vld [vmem:[#allocation2 + $0x8] sm:$0xff]
    %v73 = vld [vmem:[#allocation2 + $0x10] sm:$0xff]
    %74 = vset.pattern.permute.xlu0 3
    %75 = vperm.xlu0 %74, %v41
    %v76 = vpop.permute.xlu0 %75
    %v78 = vmul.f32 %v76, %v71
    %v79 = vmul.f32 %v76, %v72
    %v80 = vmul.f32 %v76, %v73
    %84 = vrot.lane.b32.xlu0 %v78, 112
    %v85 = vpop.permute.xlu0 %84
    %86 = vrot.lane.b32.xlu0 %v79, 112
    %v87 = vpop.permute.xlu0 %86
    %88 = vrot.lane.b32.xlu0 %v80, 112
    %v89 = vpop.permute.xlu0 %88
    %vm90 = vcmask 916480
    %v91 = vsel %vm90, %v85, %v87
    %v92 = vsel %vm90, %v87, %v89
    %v95 = vadd.f32 %v69, %v91
    %v96 = vadd.f32 %v70, %v92
    %97 = vset.pattern.permute.xlu0 6
    %98 = vperm.xlu0 %97, %v41
    %v99 = vpop.permute.xlu0 %98
    %v101 = vmul.f32 %v99, %v71
    %v102 = vmul.f32 %v99, %v72
    %v103 = vmul.f32 %v99, %v73
    %107 = vrot.lane.b32.xlu0 %v101, 96
    %v108 = vpop.permute.xlu0 %107
    %109 = vrot.lane.b32.xlu0 %v102, 96
    %v110 = vpop.permute.xlu0 %109
    %111 = vrot.lane.b32.xlu0 %v103, 96
    %v112 = vpop.permute.xlu0 %111
    %vm113 = vcmask 785408
    %v114 = vsel %vm113, %v108, %v110
    %v115 = vsel %vm113, %v110, %v112
    %v118 = vadd.f32 %v95, %v114
    %v119 = vadd.f32 %v96, %v115
    %v121 = vlaneseq
    %v122 = vshrl.u32 %v121, 7
    %v123 = vsub.s32 0, %v122
    %v124 = vrot.slane %v42, %v123
    %v125 = vlaneseq
    %v126 = vshrl.u32 %v125, 7
    %v127 = vsub.s32 2, %v126
    %v128 = vrot.slane %v42, %v127
    %v131 = vlaneseq
    %v132 = vshrl.u32 %v131, 7
    %v133 = vsub.s32 0, %v132
    %v134 = vrot.slane %v124, %v133
    %v135 = vlaneseq
    %v136 = vshrl.u32 %v135, 7
    %v137 = vsub.s32 0, %v136
    %v138 = vrot.slane %v128, %v137
    %v139 = vmul.f32 %v118, %v134
    %v140 = vmul.f32 %v119, %v138
    %141 = vset.pattern.permute.xlu0 1
    %142 = vperm.xlu0 %141, %v41
    %v143 = vpop.permute.xlu0 %142
    %v145 = vmul.f32 %v143, %v71
    %v146 = vmul.f32 %v143, %v72
    %v147 = vmul.f32 %v143, %v73
    %148 = vset.pattern.permute.xlu0 4
    %149 = vperm.xlu0 %148, %v41
    %v150 = vpop.permute.xlu0 %149
    %v152 = vmul.f32 %v150, %v71
    %v153 = vmul.f32 %v150, %v72
    %v154 = vmul.f32 %v150, %v73
    %158 = vrot.lane.b32.xlu0 %v152, 112
    %v159 = vpop.permute.xlu0 %158
    %160 = vrot.lane.b32.xlu0 %v153, 112
    %v161 = vpop.permute.xlu0 %160
    %162 = vrot.lane.b32.xlu0 %v154, 112
    %v163 = vpop.permute.xlu0 %162
    %v164 = vsel %vm90, %v159, %v161
    %v165 = vsel %vm90, %v161, %v163
    %v169 = vadd.f32 %v145, %v164
    %v170 = vadd.f32 %v146, %v165
    %v171 = vadd.f32 %v147, %v163
    %172 = vset.pattern.permute.xlu0 7
    %173 = vperm.xlu0 %172, %v41
    %v174 = vpop.permute.xlu0 %173
    %v176 = vmul.f32 %v174, %v71
    %v177 = vmul.f32 %v174, %v72
    %v178 = vmul.f32 %v174, %v73
    %182 = vrot.lane.b32.xlu0 %v176, 96
    %v183 = vpop.permute.xlu0 %182
    %184 = vrot.lane.b32.xlu0 %v177, 96
    %v185 = vpop.permute.xlu0 %184
    %186 = vrot.lane.b32.xlu0 %v178, 96
    %v187 = vpop.permute.xlu0 %186
    %v188 = vsel %vm113, %v183, %v185
    %v189 = vsel %vm113, %v185, %v187
    %v193 = vadd.f32 %v169, %v188
    %v194 = vadd.f32 %v170, %v189
    %v195 = vadd.f32 %v171, %v187
    %199 = vrot.lane.b32.xlu0 %v193, 127
    %v200 = vpop.permute.xlu0 %199
    %201 = vrot.lane.b32.xlu0 %v194, 127
    %v202 = vpop.permute.xlu0 %201
    %203 = vrot.lane.b32.xlu0 %v195, 127
    %v204 = vpop.permute.xlu0 %203
    %vm205 = vcmask 1039360
    %v206 = vsel %vm205, %v200, %v202
    %v207 = vsel %vm205, %v202, %v204
    %v210 = vadd.f32 %v139, %v206
    %v211 = vadd.f32 %v140, %v207
    %212 = vset.pattern.permute.xlu0 2
    %213 = vperm.xlu0 %212, %v41
    %v214 = vpop.permute.xlu0 %213
    %v216 = vmul.f32 %v214, %v71
    %v217 = vmul.f32 %v214, %v72
    %v218 = vmul.f32 %v214, %v73
    %219 = vset.pattern.permute.xlu0 5
    %220 = vperm.xlu0 %219, %v41
    %v221 = vpop.permute.xlu0 %220
    %v223 = vmul.f32 %v221, %v71
    %v224 = vmul.f32 %v221, %v72
    %v225 = vmul.f32 %v221, %v73
    %229 = vrot.lane.b32.xlu0 %v223, 112
    %v230 = vpop.permute.xlu0 %229
    %231 = vrot.lane.b32.xlu0 %v224, 112
    %v232 = vpop.permute.xlu0 %231
    %233 = vrot.lane.b32.xlu0 %v225, 112
    %v234 = vpop.permute.xlu0 %233
    %v235 = vsel %vm90, %v230, %v232
    %v236 = vsel %vm90, %v232, %v234
    %v240 = vadd.f32 %v216, %v235
    %v241 = vadd.f32 %v217, %v236
    %v242 = vadd.f32 %v218, %v234
    %243 = vset.pattern.permute.xlu0 8
    %244 = vperm.xlu0 %243, %v41
    %v245 = vpop.permute.xlu0 %244
    %v247 = vmul.f32 %v245, %v71
    %v248 = vmul.f32 %v245, %v72
    %v249 = vmul.f32 %v245, %v73
    %253 = vrot.lane.b32.xlu0 %v247, 96
    %v254 = vpop.permute.xlu0 %253
    %255 = vrot.lane.b32.xlu0 %v248, 96
    %v256 = vpop.permute.xlu0 %255
    %257 = vrot.lane.b32.xlu0 %v249, 96
    %v258 = vpop.permute.xlu0 %257
    %v259 = vsel %vm113, %v254, %v256
    %v260 = vsel %vm113, %v256, %v258
    %v264 = vadd.f32 %v240, %v259
    %v265 = vadd.f32 %v241, %v260
    %v266 = vadd.f32 %v242, %v258
    %v267 = vlaneseq
    %v268 = vshrl.u32 %v267, 7
    %v269 = vsub.s32 1, %v268
    %v270 = vrot.slane %v42, %v269
    %v271 = vlaneseq
    %v272 = vshrl.u32 %v271, 7
    %v273 = vsub.s32 3, %v272
    %v274 = vrot.slane %v42, %v273
    %v277 = vlaneseq
    %v278 = vshrl.u32 %v277, 7
    %v279 = vsub.s32 1, %v278
    %v280 = vrot.slane %v270, %v279
    %v281 = vlaneseq
    %v282 = vshrl.u32 %v281, 7
    %v283 = vsub.s32 1, %v282
    %v284 = vrot.slane %v274, %v283
    %287 = vrot.lane.b32.xlu0 %v280, 2
    %v288 = vpop.permute.xlu0 %287
    %289 = vrot.lane.b32.xlu0 %v284, 2
    %v290 = vpop.permute.xlu0 %289
    %vm291 = vcmask 15360
    %v292 = vsel %vm291, %v288, %v290
    %v296 = vmul.f32 %v264, %v288
    %v297 = vmul.f32 %v265, %v292
    %v298 = vmul.f32 %v266, %v290
    %302 = vrot.lane.b32.xlu0 %v296, 126
    %v303 = vpop.permute.xlu0 %302
    %304 = vrot.lane.b32.xlu0 %v297, 126
    %v305 = vpop.permute.xlu0 %304
    %306 = vrot.lane.b32.xlu0 %v298, 126
    %v307 = vpop.permute.xlu0 %306
    %vm308 = vcmask 1031168
    %v309 = vsel %vm308, %v303, %v305
    %v310 = vsel %vm308, %v305, %v307
    %v313 = vadd.f32 %v210, %v309
    %v314 = vadd.f32 %v211, %v310
    %315 = vset.pattern.permute.xlu0 23
    %316 = vperm.xlu0 %315, %v41
    %v317 = vpop.permute.xlu0 %316
    %v319 = vlaneseq
    %v320 = vshrl.u32 %v319, 7
    %v321 = vsub.s32 0, %v320
    %v322 = vrot.slane %v313, %v321
    %v323 = vlaneseq
    %v324 = vshrl.u32 %v323, 7
    %v325 = vsub.s32 0, %v324
    %v326 = vrot.slane %v314, %v325
    %v327 = vmul.f32 %v317, %v322
    %v328 = vmul.f32 %v317, %v326
    %329 = vset.pattern.permute.xlu0 24
    %330 = vperm.xlu0 %329, %v41
    %v331 = vpop.permute.xlu0 %330
    %v333 = vlaneseq
    %v334 = vshrl.u32 %v333, 7
    %v335 = vsub.s32 1, %v334
    %v336 = vrot.slane %v313, %v335
    %v337 = vlaneseq
    %v338 = vshrl.u32 %v337, 7
    %v339 = vsub.s32 1, %v338
    %v340 = vrot.slane %v314, %v339
    %v341 = vmul.f32 %v331, %v336
    %v342 = vmul.f32 %v331, %v340
    %v343 = vadd.f32 %v327, %v341
    %v344 = vadd.f32 %v328, %v342
    %345 = vset.pattern.permute.xlu0 25
    %346 = vperm.xlu0 %345, %v41
    %v347 = vpop.permute.xlu0 %346
    %v349 = vlaneseq
    %v350 = vshrl.u32 %v349, 7
    %v351 = vsub.s32 2, %v350
    %v352 = vrot.slane %v313, %v351
    %v353 = vlaneseq
    %v354 = vshrl.u32 %v353, 7
    %v355 = vsub.s32 2, %v354
    %v356 = vrot.slane %v314, %v355
    %v357 = vmul.f32 %v347, %v352
    %v358 = vmul.f32 %v347, %v356
    %v359 = vadd.f32 %v343, %v357
    %v360 = vadd.f32 %v344, %v358
    %361 = vset.pattern.permute.xlu0 26
    %362 = vperm.xlu0 %361, %v41
    %v363 = vpop.permute.xlu0 %362
    %v365 = vlaneseq
    %v366 = vshrl.u32 %v365, 7
    %v367 = vsub.s32 3, %v366
    %v368 = vrot.slane %v313, %v367
    %v369 = vlaneseq
    %v370 = vshrl.u32 %v369, 7
    %v371 = vsub.s32 3, %v370
    %v372 = vrot.slane %v314, %v371
    %v373 = vmul.f32 %v363, %v368
    %v374 = vmul.f32 %v363, %v372
    %v375 = vadd.f32 %v359, %v373
    %v376 = vadd.f32 %v360, %v374
    %377 = vset.pattern.permute.xlu0 27
    %378 = vperm.xlu0 %377, %v41
    %v379 = vpop.permute.xlu0 %378
    %v381 = vlaneseq
    %v382 = vshrl.u32 %v381, 7
    %v383 = vsub.s32 4, %v382
    %v384 = vrot.slane %v313, %v383
    %v385 = vlaneseq
    %v386 = vshrl.u32 %v385, 7
    %v387 = vsub.s32 4, %v386
    %v388 = vrot.slane %v314, %v387
    %v389 = vmul.f32 %v379, %v384
    %v390 = vmul.f32 %v379, %v388
    %v391 = vadd.f32 %v375, %v389
    %v392 = vadd.f32 %v376, %v390
    %393 = vset.pattern.permute.xlu0 28
    %394 = vperm.xlu0 %393, %v41
    %v395 = vpop.permute.xlu0 %394
    %v397 = vlaneseq
    %v398 = vshrl.u32 %v397, 7
    %v399 = vsub.s32 5, %v398
    %v400 = vrot.slane %v313, %v399
    %v401 = vlaneseq
    %v402 = vshrl.u32 %v401, 7
    %v403 = vsub.s32 5, %v402
    %v404 = vrot.slane %v314, %v403
    %v405 = vmul.f32 %v395, %v400
    %v406 = vmul.f32 %v395, %v404
    %v407 = vadd.f32 %v391, %v405
    %v408 = vadd.f32 %v392, %v406
    %409 = vset.pattern.permute.xlu0 29
    %410 = vperm.xlu0 %409, %v41
    %v411 = vpop.permute.xlu0 %410
    %v413 = vlaneseq
    %v414 = vshrl.u32 %v413, 7
    %v415 = vsub.s32 6, %v414
    %v416 = vrot.slane %v313, %v415
    %v417 = vlaneseq
    %v418 = vshrl.u32 %v417, 7
    %v419 = vsub.s32 6, %v418
    %v420 = vrot.slane %v314, %v419
    %v421 = vmul.f32 %v411, %v416
    %v422 = vmul.f32 %v411, %v420
    %v423 = vadd.f32 %v407, %v421
    %v424 = vadd.f32 %v408, %v422
    %425 = vset.pattern.permute.xlu0 30
    %426 = vperm.xlu0 %425, %v41
    %v427 = vpop.permute.xlu0 %426
    %v429 = vlaneseq
    %v430 = vshrl.u32 %v429, 7
    %v431 = vsub.s32 7, %v430
    %v432 = vrot.slane %v313, %v431
    %v433 = vlaneseq
    %v434 = vshrl.u32 %v433, 7
    %v435 = vsub.s32 7, %v434
    %v436 = vrot.slane %v314, %v435
    %v437 = vmul.f32 %v427, %v432
    %v438 = vmul.f32 %v427, %v436
    %v439 = vadd.f32 %v423, %v437
    %v440 = vadd.f32 %v424, %v438
    %441 = vset.pattern.permute.xlu0 9
    %442 = vperm.xlu0 %441, %v41
    %v443 = vpop.permute.xlu0 %442
    %v445 = vmul.f32 %v439, %v443
    %v446 = vmul.f32 %v440, %v443
    %447 = vset.pattern.permute.xlu0 10
    %448 = vperm.xlu0 %447, %v41
    %v449 = vpop.permute.xlu0 %448
    %v451 = vadd.f32 %v445, %v449
    %v452 = vadd.f32 %v446, %v449
    %vm453 = vcmp.gt.f32.partialorder %v451, 0.0
    %vm454 = vcmp.gt.f32.partialorder %v452, 0.0
    %455 = vset.pattern.permute.xlu0 11
    %456 = vperm.xlu0 %455, %v41
    %v457 = vpop.permute.xlu0 %456
    %v459 = vmul.f32 %v457, %v451
    %v460 = vmul.f32 %v457, %v452
    %v461 = vsel %vm453, %v451, %v459
    %v462 = vsel %vm454, %v452, %v460
    %463 = vst [vmem:[#allocation3] sm:$0xff] 0.0
    %464 = vst [vmem:[#allocation3 + $0x8] sm:$0xff] 0.0
    %465 = vst.msk [vmem:[#allocation3 + $0x10] sm:$0xff] %vm45, 0.0
    %468 = vrot.lane.b32.xlu0 %v461, 17
    %v469 = vpop.permute.xlu0 %468
    %470 = vrot.lane.b32.xlu0 %v462, 17
    %v471 = vpop.permute.xlu0 %470
    %v472 = vsel %vm53, %v469, %v471
    %476 = vst.msk [vmem:[#allocation3] sm:$0xff] %vm58, %v469
    %477 = vst [vmem:[#allocation3 + $0x8] sm:$0xff] %v472
    %478 = vst.msk [vmem:[#allocation3 + $0x10] sm:$0xff] %vm53, %v471
    %v479 = vld [vmem:[#allocation3] sm:$0xff]
    %v480 = vld [vmem:[#allocation3 + $0x8] sm:$0xff]
    %481 = vset.pattern.permute.xlu0 12
    %482 = vperm.xlu0 %481, %v41
    %v483 = vpop.permute.xlu0 %482
    %v485 = vmul.f32 %v483, %v479
    %v486 = vmul.f32 %v483, %v480
    %v487 = vld [vmem:[#allocation3] sm:$0xff]
    %v488 = vld [vmem:[#allocation3 + $0x8] sm:$0xff]
    %v489 = vld [vmem:[#allocation3 + $0x10] sm:$0xff]
    %490 = vset.pattern.permute.xlu0 15
    %491 = vperm.xlu0 %490, %v41
    %v492 = vpop.permute.xlu0 %491
    %v494 = vmul.f32 %v492, %v487
    %v495 = vmul.f32 %v492, %v488
    %v496 = vmul.f32 %v492, %v489
    %500 = vrot.lane.b32.xlu0 %v494, 112
    %v501 = vpop.permute.xlu0 %500
    %502 = vrot.lane.b32.xlu0 %v495, 112
    %v503 = vpop.permute.xlu0 %502
    %504 = vrot.lane.b32.xlu0 %v496, 112
    %v505 = vpop.permute.xlu0 %504
    %v506 = vsel %vm90, %v501, %v503
    %v507 = vsel %vm90, %v503, %v505
    %v510 = vadd.f32 %v485, %v506
    %v511 = vadd.f32 %v486, %v507
    %512 = vset.pattern.permute.xlu0 18
    %513 = vperm.xlu0 %512, %v41
    %v514 = vpop.permute.xlu0 %513
    %v516 = vmul.f32 %v514, %v487
    %v517 = vmul.f32 %v514, %v488
    %v518 = vmul.f32 %v514, %v489
    %522 = vrot.lane.b32.xlu0 %v516, 96
    %v523 = vpop.permute.xlu0 %522
    %524 = vrot.lane.b32.xlu0 %v517, 96
    %v525 = vpop.permute.xlu0 %524
    %526 = vrot.lane.b32.xlu0 %v518, 96
    %v527 = vpop.permute.xlu0 %526
    %v528 = vsel %vm113, %v523, %v525
    %v529 = vsel %vm113, %v525, %v527
    %v532 = vadd.f32 %v510, %v528
    %v533 = vadd.f32 %v511, %v529
    %v534 = vmul.f32 %v532, %v134
    %v535 = vmul.f32 %v533, %v138
    %536 = vset.pattern.permute.xlu0 13
    %537 = vperm.xlu0 %536, %v41
    %v538 = vpop.permute.xlu0 %537
    %v540 = vmul.f32 %v538, %v487
    %v541 = vmul.f32 %v538, %v488
    %v542 = vmul.f32 %v538, %v489
    %543 = vset.pattern.permute.xlu0 16
    %544 = vperm.xlu0 %543, %v41
    %v545 = vpop.permute.xlu0 %544
    %v547 = vmul.f32 %v545, %v487
    %v548 = vmul.f32 %v545, %v488
    %v549 = vmul.f32 %v545, %v489
    %553 = vrot.lane.b32.xlu0 %v547, 112
    %v554 = vpop.permute.xlu0 %553
    %555 = vrot.lane.b32.xlu0 %v548, 112
    %v556 = vpop.permute.xlu0 %555
    %557 = vrot.lane.b32.xlu0 %v549, 112
    %v558 = vpop.permute.xlu0 %557
    %v559 = vsel %vm90, %v554, %v556
    %v560 = vsel %vm90, %v556, %v558
    %v564 = vadd.f32 %v540, %v559
    %v565 = vadd.f32 %v541, %v560
    %v566 = vadd.f32 %v542, %v558
    %567 = vset.pattern.permute.xlu0 19
    %568 = vperm.xlu0 %567, %v41
    %v569 = vpop.permute.xlu0 %568
    %v571 = vmul.f32 %v569, %v487
    %v572 = vmul.f32 %v569, %v488
    %v573 = vmul.f32 %v569, %v489
    %577 = vrot.lane.b32.xlu0 %v571, 96
    %v578 = vpop.permute.xlu0 %577
    %579 = vrot.lane.b32.xlu0 %v572, 96
    %v580 = vpop.permute.xlu0 %579
    %581 = vrot.lane.b32.xlu0 %v573, 96
    %v582 = vpop.permute.xlu0 %581
    %v583 = vsel %vm113, %v578, %v580
    %v584 = vsel %vm113, %v580, %v582
    %v588 = vadd.f32 %v564, %v583
    %v589 = vadd.f32 %v565, %v584
    %v590 = vadd.f32 %v566, %v582
    %594 = vrot.lane.b32.xlu0 %v588, 127
    %v595 = vpop.permute.xlu0 %594
    %596 = vrot.lane.b32.xlu0 %v589, 127
    %v597 = vpop.permute.xlu0 %596
    %598 = vrot.lane.b32.xlu0 %v590, 127
    %v599 = vpop.permute.xlu0 %598
    %v600 = vsel %vm205, %v595, %v597
    %v601 = vsel %vm205, %v597, %v599
    %v604 = vadd.f32 %v534, %v600
    %v605 = vadd.f32 %v535, %v601
    %606 = vset.pattern.permute.xlu0 14
    %607 = vperm.xlu0 %606, %v41
    %v608 = vpop.permute.xlu0 %607
    %v610 = vmul.f32 %v608, %v487
    %v611 = vmul.f32 %v608, %v488
    %v612 = vmul.f32 %v608, %v489
    %613 = vset.pattern.permute.xlu0 17
    %614 = vperm.xlu0 %613, %v41
    %v615 = vpop.permute.xlu0 %614
    %v617 = vmul.f32 %v615, %v487
    %v618 = vmul.f32 %v615, %v488
    %v619 = vmul.f32 %v615, %v489
    %623 = vrot.lane.b32.xlu0 %v617, 112
    %v624 = vpop.permute.xlu0 %623
    %625 = vrot.lane.b32.xlu0 %v618, 112
    %v626 = vpop.permute.xlu0 %625
    %627 = vrot.lane.b32.xlu0 %v619, 112
    %v628 = vpop.permute.xlu0 %627
    %v629 = vsel %vm90, %v624, %v626
    %v630 = vsel %vm90, %v626, %v628
    %v634 = vadd.f32 %v610, %v629
    %v635 = vadd.f32 %v611, %v630
    %v636 = vadd.f32 %v612, %v628
    %637 = vset.pattern.permute.xlu0 20
    %638 = vperm.xlu0 %637, %v41
    %v639 = vpop.permute.xlu0 %638
    %v641 = vmul.f32 %v639, %v487
    %v642 = vmul.f32 %v639, %v488
    %v643 = vmul.f32 %v639, %v489
    %647 = vrot.lane.b32.xlu0 %v641, 96
    %v648 = vpop.permute.xlu0 %647
    %649 = vrot.lane.b32.xlu0 %v642, 96
    %v650 = vpop.permute.xlu0 %649
    %651 = vrot.lane.b32.xlu0 %v643, 96
    %v652 = vpop.permute.xlu0 %651
    %v653 = vsel %vm113, %v648, %v650
    %v654 = vsel %vm113, %v650, %v652
    %v658 = vadd.f32 %v634, %v653
    %v659 = vadd.f32 %v635, %v654
    %v660 = vadd.f32 %v636, %v652
    %v661 = vmul.f32 %v658, %v288
    %v662 = vmul.f32 %v659, %v292
    %v663 = vmul.f32 %v660, %v290
    %667 = vrot.lane.b32.xlu0 %v661, 126
    %v668 = vpop.permute.xlu0 %667
    %669 = vrot.lane.b32.xlu0 %v662, 126
    %v670 = vpop.permute.xlu0 %669
    %671 = vrot.lane.b32.xlu0 %v663, 126
    %v672 = vpop.permute.xlu0 %671
    %v673 = vsel %vm308, %v668, %v670
    %v674 = vsel %vm308, %v670, %v672
    %v677 = vadd.f32 %v604, %v673
    %v678 = vadd.f32 %v605, %v674
    %679 = vset.pattern.permute.xlu0 31
    %680 = vperm.xlu0 %679, %v41
    %v681 = vpop.permute.xlu0 %680
    %v683 = vlaneseq
    %v684 = vshrl.u32 %v683, 7
    %v685 = vsub.s32 0, %v684
    %v686 = vrot.slane %v677, %v685
    %v687 = vlaneseq
    %v688 = vshrl.u32 %v687, 7
    %v689 = vsub.s32 0, %v688
    %v690 = vrot.slane %v678, %v689
    %v691 = vmul.f32 %v681, %v686
    %v692 = vmul.f32 %v681, %v690
    %693 = vset.pattern.permute.xlu0 32
    %694 = vperm.xlu0 %693, %v41
    %v695 = vpop.permute.xlu0 %694
    %v697 = vlaneseq
    %v698 = vshrl.u32 %v697, 7
    %v699 = vsub.s32 1, %v698
    %v700 = vrot.slane %v677, %v699
    %v701 = vlaneseq
    %v702 = vshrl.u32 %v701, 7
    %v703 = vsub.s32 1, %v702
    %v704 = vrot.slane %v678, %v703
    %v705 = vmul.f32 %v695, %v700
    %v706 = vmul.f32 %v695, %v704
    %v707 = vadd.f32 %v691, %v705
    %v708 = vadd.f32 %v692, %v706
    %709 = vset.pattern.permute.xlu0 33
    %710 = vperm.xlu0 %709, %v41
    %v711 = vpop.permute.xlu0 %710
    %v713 = vlaneseq
    %v714 = vshrl.u32 %v713, 7
    %v715 = vsub.s32 2, %v714
    %v716 = vrot.slane %v677, %v715
    %v717 = vlaneseq
    %v718 = vshrl.u32 %v717, 7
    %v719 = vsub.s32 2, %v718
    %v720 = vrot.slane %v678, %v719
    %v721 = vmul.f32 %v711, %v716
    %v722 = vmul.f32 %v711, %v720
    %v723 = vadd.f32 %v707, %v721
    %v724 = vadd.f32 %v708, %v722
    %725 = vset.pattern.permute.xlu0 34
    %726 = vperm.xlu0 %725, %v41
    %v727 = vpop.permute.xlu0 %726
    %v729 = vlaneseq
    %v730 = vshrl.u32 %v729, 7
    %v731 = vsub.s32 3, %v730
    %v732 = vrot.slane %v677, %v731
    %v733 = vlaneseq
    %v734 = vshrl.u32 %v733, 7
    %v735 = vsub.s32 3, %v734
    %v736 = vrot.slane %v678, %v735
    %v737 = vmul.f32 %v727, %v732
    %v738 = vmul.f32 %v727, %v736
    %v739 = vadd.f32 %v723, %v737
    %v740 = vadd.f32 %v724, %v738
    %741 = vset.pattern.permute.xlu0 35
    %742 = vperm.xlu0 %741, %v41
    %v743 = vpop.permute.xlu0 %742
    %v745 = vlaneseq
    %v746 = vshrl.u32 %v745, 7
    %v747 = vsub.s32 4, %v746
    %v748 = vrot.slane %v677, %v747
    %v749 = vlaneseq
    %v750 = vshrl.u32 %v749, 7
    %v751 = vsub.s32 4, %v750
    %v752 = vrot.slane %v678, %v751
    %v753 = vmul.f32 %v743, %v748
    %v754 = vmul.f32 %v743, %v752
    %v755 = vadd.f32 %v739, %v753
    %v756 = vadd.f32 %v740, %v754
    %757 = vset.pattern.permute.xlu0 36
    %758 = vperm.xlu0 %757, %v41
    %v759 = vpop.permute.xlu0 %758
    %v761 = vlaneseq
    %v762 = vshrl.u32 %v761, 7
    %v763 = vsub.s32 5, %v762
    %v764 = vrot.slane %v677, %v763
    %v765 = vlaneseq
    %v766 = vshrl.u32 %v765, 7
    %v767 = vsub.s32 5, %v766
    %v768 = vrot.slane %v678, %v767
    %v769 = vmul.f32 %v759, %v764
    %v770 = vmul.f32 %v759, %v768
    %v771 = vadd.f32 %v755, %v769
    %v772 = vadd.f32 %v756, %v770
    %773 = vset.pattern.permute.xlu0 37
    %774 = vperm.xlu0 %773, %v41
    %v775 = vpop.permute.xlu0 %774
    %v777 = vlaneseq
    %v778 = vshrl.u32 %v777, 7
    %v779 = vsub.s32 6, %v778
    %v780 = vrot.slane %v677, %v779
    %v781 = vlaneseq
    %v782 = vshrl.u32 %v781, 7
    %v783 = vsub.s32 6, %v782
    %v784 = vrot.slane %v678, %v783
    %v785 = vmul.f32 %v775, %v780
    %v786 = vmul.f32 %v775, %v784
    %v787 = vadd.f32 %v771, %v785
    %v788 = vadd.f32 %v772, %v786
    %789 = vset.pattern.permute.xlu0 38
    %790 = vperm.xlu0 %789, %v41
    %v791 = vpop.permute.xlu0 %790
    %v793 = vlaneseq
    %v794 = vshrl.u32 %v793, 7
    %v795 = vsub.s32 7, %v794
    %v796 = vrot.slane %v677, %v795
    %v797 = vlaneseq
    %v798 = vshrl.u32 %v797, 7
    %v799 = vsub.s32 7, %v798
    %v800 = vrot.slane %v678, %v799
    %v801 = vmul.f32 %v791, %v796
    %v802 = vmul.f32 %v791, %v800
    %v803 = vadd.f32 %v787, %v801
    %v804 = vadd.f32 %v788, %v802
    %805 = vset.pattern.permute.xlu0 21
    %806 = vperm.xlu0 %805, %v41
    %v807 = vpop.permute.xlu0 %806
    %v809 = vmul.f32 %v803, %v807
    %v810 = vmul.f32 %v804, %v807
    %811 = vset.pattern.permute.xlu0 22
    %812 = vperm.xlu0 %811, %v41
    %v813 = vpop.permute.xlu0 %812
    %v815 = vadd.f32 %v809, %v813
    %v816 = vadd.f32 %v810, %v813
    %v817 = vadd.f32 %v815, %v39
    %v818 = vadd.f32 %v816, %v40
    %819 = vst [vmem:[#allocation9] sm:$0xff] %v817
    %820 = vst [vmem:[#allocation9 + $0x8] sm:$0xff] %v818
    // Predicated region
    $region22: #{tpu_custom_call.1} parent=1 // pred_check
      _
    $region23: #{tpu_custom_call.1} parent=1 // pred_check_branch
      %822 = sbr.rel (0) target = $region25
    $region24: #{tpu_custom_call.1} parent=1 // pred_region
      %s824 = ssub.s32 256, 256
      %825 = vsyncadd [#allocation6], %s824
      %s827 = sshll.u32 [#allocation9], 4
      %s828 = int_to_ptr.vmem [resolvable:$true] %s827
      %830 = dma.vmem_to_hbm [thread:$0]  %s828, 256, %s3, [#allocation6]
    $region25: #{tpu_custom_call.1} parent=1 // pred_fallthru
      _
    // Predicated region
    $region26: #{tpu_custom_call.1} parent=1 // pred_check
      _
    $region27: #{tpu_custom_call.1} parent=1 // pred_check_branch
      %832 = sbr.rel (0) target = $region29
    $region28: #{tpu_custom_call.1} parent=1 // pred_region
      %833 = dma.done [#allocation6], 256
    $region29: #{tpu_custom_call.1} parent=1 // pred_fallthru
      _
    %834 = vsyncpa [#allocation5], 1
    %835 = vsyncpa [#allocation8], 1
    %836 = vsyncpa [#allocation6], 1

</llo_original>
